<compile_context>
chip_gen: v5e
topology: v5e:2x2
jax: 0.10.0
libtpu: 0.0.40
codegen_flags: <defaults>
</compile_context>

<pallas_src>
import functools

import jax
import jax.numpy as jnp
from jax.experimental import pallas as pl
from jax.experimental.pallas import tpu as pltpu

BN_EPS = 1e-5
LANE = 128


def _round_up(x, m):
    return ((x + m - 1) // m) * m


def _make_mlp_kernel(n_hidden_layers, use_bn):
    """Build a fused kernel for a fixed (static) layer count / BN flag."""
    per = 4 if use_bn else 2

    def kernel(*refs):
        # refs = x, [w, b, (scale, shift)] * n_hidden, w_out, b_out, o
        x_ref = refs[0]
        o_ref = refs[-1]
        h = x_ref[...]                                       # f32 [TB, D_pad]
        idx = 1
        for _ in range(n_hidden_layers):
            w = refs[idx][...]                               # bf16 [K_pad, N_pad]
            b = refs[idx + 1][...]                           # f32  [1, N_pad]
            y = jnp.dot(h.astype(jnp.bfloat16), w,
                        preferred_element_type=jnp.float32)  # MXU, f32 accumulate
            y = jnp.maximum(y + b, 0.0)                      # bias + ReLU (f32 epilogue)
            # TODO(synk): training-mode dropout (random mask + 1/(1-p) scale) not
            # implemented; eval-mode dropout is identity.
            if use_bn:
                scale = refs[idx + 2][...]
                shift = refs[idx + 3][...]
                y = y * scale + shift                        # folded BN (running stats)
            h = y
            idx += per
        w = refs[idx][...]
        b = refs[idx + 1][...]
        y = jnp.dot(h.astype(jnp.bfloat16), w,
                    preferred_element_type=jnp.float32) + b
        o_ref[...] = y.astype(o_ref.dtype)

    return kernel


@functools.partial(jax.jit, static_argnames=("use_bn",))
def mlp_forward(x, hidden_params, out_params, use_bn=True):
    B, input_dims = x.shape
    n_hidden_layers = len(hidden_params)

    # ---- batch tiling (lane-dense, multiple-of-8 sublane tiles) ----
    TB = 256 if B > 256 else _round_up(B, 8)
    B_pad = _round_up(B, TB)
    grid = (B_pad // TB,)

    din_pad = _round_up(input_dims, LANE)
    x_pad = jnp.pad(x.astype(jnp.float32),
                    ((0, B_pad - B), (0, din_pad - input_dims)))

    args = [x_pad]
    in_specs = [pl.BlockSpec((TB, din_pad), lambda i: (i, 0))]

    flops = 0
    bytes_accessed = B_pad * din_pad * 4
    max_feat_pad = din_pad

    cur_pad = din_pad
    for layer in hidden_params:
        w, b = layer["w"], layer["b"]
        k, n = w.shape
        n_pad = _round_up(n, LANE)
        max_feat_pad = max(max_feat_pad, n_pad)
        w_p = jnp.pad(w, ((0, cur_pad - k), (0, n_pad - n))).astype(jnp.bfloat16)
        b_p = jnp.pad(b, ((0, 0), (0, n_pad - n))).astype(jnp.float32)
        args += [w_p, b_p]
        in_specs += [
            pl.BlockSpec((cur_pad, n_pad), lambda i: (0, 0)),   # weights stay resident
            pl.BlockSpec((1, n_pad), lambda i: (0, 0)),
        ]
        bytes_accessed += cur_pad * n_pad * 2 + n_pad * 4
        if use_bn:
            # Fold BN running stats into a single scale/shift.
            scale = layer["gamma"] * jax.lax.rsqrt(layer["var"] + BN_EPS)
            shift = layer["beta"] - layer["mean"] * scale
            scale_p = jnp.pad(scale, ((0, 0), (0, n_pad - n))).astype(jnp.float32)
            shift_p = jnp.pad(shift, ((0, 0), (0, n_pad - n))).astype(jnp.float32)
            args += [scale_p, shift_p]
            in_specs += [
                pl.BlockSpec((1, n_pad), lambda i: (0, 0)),
                pl.BlockSpec((1, n_pad), lambda i: (0, 0)),
            ]
            bytes_accessed += 2 * n_pad * 4
        flops += 2 * B_pad * cur_pad * n_pad
        cur_pad = n_pad

    w, b = out_params["w"], out_params["b"]
    k, n_class = w.shape
    nout_pad = _round_up(n_class, LANE)
    max_feat_pad = max(max_feat_pad, nout_pad)
    w_p = jnp.pad(w, ((0, cur_pad - k), (0, nout_pad - n_class))).astype(jnp.bfloat16)
    b_p = jnp.pad(b, ((0, 0), (0, nout_pad - n_class))).astype(jnp.float32)
    args += [w_p, b_p]
    in_specs += [
        pl.BlockSpec((cur_pad, nout_pad), lambda i: (0, 0)),
        pl.BlockSpec((1, nout_pad), lambda i: (0, 0)),
    ]
    flops += 2 * B_pad * cur_pad * nout_pad
    bytes_accessed += cur_pad * nout_pad * 2 + nout_pad * 4 + B_pad * nout_pad * 4

    # ---- VMEM budget (v7x has 64 MiB physical; keep the limit <= 48 MiB) ----
    param_bytes = sum(int(a.size) * a.dtype.itemsize for a in args[1:])
    vmem_est = (2 * param_bytes
                + 2 * (TB * din_pad * 4 + TB * nout_pad * 4)   # double-buffered I/O tiles
                + 4 * TB * max_feat_pad * 4)                   # intermediate activations
    vmem_limit = int(min(48 * 1024 * 1024, max(16 * 1024 * 1024, 2 * vmem_est)))

    kernel = _make_mlp_kernel(n_hidden_layers, use_bn)

    out_pad = pl.pallas_call(
        kernel,
        out_shape=jax.ShapeDtypeStruct((B_pad, nout_pad), jnp.float32),
        grid_spec=pltpu.PrefetchScalarGridSpec(
            num_scalar_prefetch=0,
            grid=grid,
            in_specs=in_specs,
            out_specs=pl.BlockSpec((TB, nout_pad), lambda i: (i, 0)),
        ),
        compiler_params=pltpu.CompilerParams(
            dimension_semantics=("parallel",),
            vmem_limit_bytes=vmem_limit,
        ),
        cost_estimate=pl.CostEstimate(
            flops=int(flops), transcendentals=0,
            bytes_accessed=int(bytes_accessed)),
    )(*args)

    return out_pad[:B, :n_class]


def init_mlp_params(key, input_dims, n_hiddens, n_class, use_bn):
    """Deterministic parameter init (shapes match nn.Linear / BatchNorm1d, W stored [in,out])."""
    if isinstance(n_hiddens, int):
        n_hiddens = [n_hiddens]
    params = []
    current = input_dims
    for n_hidden in n_hiddens:
        key, kw, kb, kg, kbe, km, kv = jax.random.split(key, 7)
        layer = {
            "w": jax.random.normal(kw, (current, n_hidden), jnp.float32) * 0.1,
            "b": jax.random.normal(kb, (1, n_hidden), jnp.float32) * 0.1,
        }
        if use_bn:
            layer["gamma"] = jax.random.normal(kg, (1, n_hidden), jnp.float32) * 0.1 + 1.0
            layer["beta"] = jax.random.normal(kbe, (1, n_hidden), jnp.float32) * 0.1
            layer["mean"] = jax.random.normal(km, (1, n_hidden), jnp.float32) * 0.1
            layer["var"] = jnp.abs(jax.random.normal(kv, (1, n_hidden), jnp.float32)) + 0.5
        params.append(layer)
        current = n_hidden
    key, kw, kb = jax.random.split(key, 3)
    out_layer = {
        "w": jax.random.normal(kw, (current, n_class), jnp.float32) * 0.1,
        "b": jax.random.normal(kb, (1, n_class), jnp.float32) * 0.1,
    }
    return params, out_layer


def mlp_reference(x, hidden_params, out_params, use_bn=True):
    """Pure-JAX reference using the same bf16 matmul / f32-accumulate recipe."""
    h = x
    for layer in hidden_params:
        y = jnp.dot(h.astype(jnp.bfloat16), layer["w"].astype(jnp.bfloat16),
                    preferred_element_type=jnp.float32)
        h = jnp.maximum(y + layer["b"], 0.0)
        if use_bn:
            scale = layer["gamma"] * jax.lax.rsqrt(layer["var"] + BN_EPS)
            h = h * scale + (layer["beta"] - layer["mean"] * scale)
    y = jnp.dot(h.astype(jnp.bfloat16), out_params["w"].astype(jnp.bfloat16),
                preferred_element_type=jnp.float32)
    return y + out_params["b"]


if __name__ == "__main__":
    # Small MLP: input_dims=32, n_hiddens=[64, 32], n_class=8, dropout=0.5, use_bn=True
    input_dims, n_hiddens, n_class, use_bn = 32, [64, 32], 8, True
    batch = 8

    key = jax.random.PRNGKey(0)
    key, kx = jax.random.split(key)
    x = jax.random.normal(kx, (batch, input_dims), jnp.float32)

    hidden_params, out_params = init_mlp_params(key, input_dims, n_hiddens,
                                                n_class, use_bn)

    out = mlp_forward(x, hidden_params, out_params, use_bn=use_bn)
    out = jax.block_until_ready(out)

    ref = mlp_reference(x, hidden_params, out_params, use_bn=use_bn)
    assert out.shape == (batch, n_class)
    assert jnp.allclose(out, ref, atol=2e-3, rtol=2e-3), "mismatch vs JAX reference"

    print("KERNEL_OK")
</pallas_src>

<mosaic_0001>
module attributes {stable_mosaic.version = 11 : i64} {
  func.func @kernel(%arg0: i32, %arg1: memref<8x128xf32, #tpu.memory_space<vmem>>, %arg2: memref<128x128xbf16, #tpu.memory_space<vmem>>, %arg3: memref<1x128xf32, #tpu.memory_space<vmem>>, %arg4: memref<1x128xf32, #tpu.memory_space<vmem>>, %arg5: memref<1x128xf32, #tpu.memory_space<vmem>>, %arg6: memref<128x128xbf16, #tpu.memory_space<vmem>>, %arg7: memref<1x128xf32, #tpu.memory_space<vmem>>, %arg8: memref<1x128xf32, #tpu.memory_space<vmem>>, %arg9: memref<1x128xf32, #tpu.memory_space<vmem>>, %arg10: memref<128x128xbf16, #tpu.memory_space<vmem>>, %arg11: memref<1x128xf32, #tpu.memory_space<vmem>>, %arg12: memref<8x128xf32, #tpu.memory_space<vmem>>) attributes {dimension_semantics = [#tpu.dimension_semantics<parallel>], iteration_bounds = array<i64: 1>, scalar_prefetch = 0 : i64, scratch_operands = 0 : i64, tpu.core_type = #tpu.core_type<tc>, window_params = [{transform_indices = @transform_0, window_bounds = array<i64: 8, 128>}, {pipeline_mode = #tpu.pipeline_mode<synchronous>, transform_indices = @transform_1, window_bounds = array<i64: 128, 128>}, {pipeline_mode = #tpu.pipeline_mode<synchronous>, transform_indices = @transform_2, window_bounds = array<i64: 1, 128>}, {pipeline_mode = #tpu.pipeline_mode<synchronous>, transform_indices = @transform_3, window_bounds = array<i64: 1, 128>}, {pipeline_mode = #tpu.pipeline_mode<synchronous>, transform_indices = @transform_4, window_bounds = array<i64: 1, 128>}, {pipeline_mode = #tpu.pipeline_mode<synchronous>, transform_indices = @transform_5, window_bounds = array<i64: 128, 128>}, {pipeline_mode = #tpu.pipeline_mode<synchronous>, transform_indices = @transform_6, window_bounds = array<i64: 1, 128>}, {pipeline_mode = #tpu.pipeline_mode<synchronous>, transform_indices = @transform_7, window_bounds = array<i64: 1, 128>}, {pipeline_mode = #tpu.pipeline_mode<synchronous>, transform_indices = @transform_8, window_bounds = array<i64: 1, 128>}, {pipeline_mode = #tpu.pipeline_mode<synchronous>, transform_indices = @transform_9, window_bounds = array<i64: 128, 128>}, {pipeline_mode = #tpu.pipeline_mode<synchronous>, transform_indices = @transform_10, window_bounds = array<i64: 1, 128>}, {transform_indices = @transform_11, window_bounds = array<i64: 8, 128>}]} {
    %c0 = arith.constant 0 : index
    %c0_0 = arith.constant 0 : index
    %0 = vector.load %arg1[%c0, %c0_0] : memref<8x128xf32, #tpu.memory_space<vmem>>, vector<8x128xf32>
    %c0_1 = arith.constant 0 : index
    %c0_2 = arith.constant 0 : index
    %1 = vector.load %arg2[%c0_1, %c0_2] : memref<128x128xbf16, #tpu.memory_space<vmem>>, vector<128x128xbf16>
    %c0_3 = arith.constant 0 : index
    %c0_4 = arith.constant 0 : index
    %2 = vector.load %arg3[%c0_3, %c0_4] : memref<1x128xf32, #tpu.memory_space<vmem>>, vector<1x128xf32>
    %3 = arith.truncf %0 : vector<8x128xf32> to vector<8x128xbf16>
    %cst = arith.constant dense<0.000000e+00> : vector<8x128xf32>
    %4 = tpu.matmul %3, %1, %cst {dimension_numbers = #tpu.dot_dimension_numbers<[1], [0], [0], [1], [0, 0, 1, 1], [], []>} : vector<8x128xbf16>, vector<128x128xbf16>, vector<8x128xf32> -> vector<8x128xf32>
    %5 = vector.broadcast %2 : vector<1x128xf32> to vector<8x128xf32>
    %6 = arith.addf %4, %5 : vector<8x128xf32>
    %cst_5 = arith.constant 0.000000e+00 : f32
    %7 = vector.broadcast %cst_5 : f32 to vector<8x128xf32>
    %8 = arith.maximumf %6, %7 : vector<8x128xf32>
    %c0_6 = arith.constant 0 : index
    %c0_7 = arith.constant 0 : index
    %9 = vector.load %arg4[%c0_6, %c0_7] : memref<1x128xf32, #tpu.memory_space<vmem>>, vector<1x128xf32>
    %c0_8 = arith.constant 0 : index
    %c0_9 = arith.constant 0 : index
    %10 = vector.load %arg5[%c0_8, %c0_9] : memref<1x128xf32, #tpu.memory_space<vmem>>, vector<1x128xf32>
    %11 = vector.broadcast %9 : vector<1x128xf32> to vector<8x128xf32>
    %12 = arith.mulf %8, %11 : vector<8x128xf32>
    %13 = vector.broadcast %10 : vector<1x128xf32> to vector<8x128xf32>
    %14 = arith.addf %12, %13 : vector<8x128xf32>
    %c0_10 = arith.constant 0 : index
    %c0_11 = arith.constant 0 : index
    %15 = vector.load %arg6[%c0_10, %c0_11] : memref<128x128xbf16, #tpu.memory_space<vmem>>, vector<128x128xbf16>
    %c0_12 = arith.constant 0 : index
    %c0_13 = arith.constant 0 : index
    %16 = vector.load %arg7[%c0_12, %c0_13] : memref<1x128xf32, #tpu.memory_space<vmem>>, vector<1x128xf32>
    %17 = arith.truncf %14 : vector<8x128xf32> to vector<8x128xbf16>
    %cst_14 = arith.constant dense<0.000000e+00> : vector<8x128xf32>
    %18 = tpu.matmul %17, %15, %cst_14 {dimension_numbers = #tpu.dot_dimension_numbers<[1], [0], [0], [1], [0, 0, 1, 1], [], []>} : vector<8x128xbf16>, vector<128x128xbf16>, vector<8x128xf32> -> vector<8x128xf32>
    %19 = vector.broadcast %16 : vector<1x128xf32> to vector<8x128xf32>
    %20 = arith.addf %18, %19 : vector<8x128xf32>
    %cst_15 = arith.constant 0.000000e+00 : f32
    %21 = vector.broadcast %cst_15 : f32 to vector<8x128xf32>
    %22 = arith.maximumf %20, %21 : vector<8x128xf32>
    %c0_16 = arith.constant 0 : index
    %c0_17 = arith.constant 0 : index
    %23 = vector.load %arg8[%c0_16, %c0_17] : memref<1x128xf32, #tpu.memory_space<vmem>>, vector<1x128xf32>
    %c0_18 = arith.constant 0 : index
    %c0_19 = arith.constant 0 : index
    %24 = vector.load %arg9[%c0_18, %c0_19] : memref<1x128xf32, #tpu.memory_space<vmem>>, vector<1x128xf32>
    %25 = vector.broadcast %23 : vector<1x128xf32> to vector<8x128xf32>
    %26 = arith.mulf %22, %25 : vector<8x128xf32>
    %27 = vector.broadcast %24 : vector<1x128xf32> to vector<8x128xf32>
    %28 = arith.addf %26, %27 : vector<8x128xf32>
    %c0_20 = arith.constant 0 : index
    %c0_21 = arith.constant 0 : index
    %29 = vector.load %arg10[%c0_20, %c0_21] : memref<128x128xbf16, #tpu.memory_space<vmem>>, vector<128x128xbf16>
    %c0_22 = arith.constant 0 : index
    %c0_23 = arith.constant 0 : index
    %30 = vector.load %arg11[%c0_22, %c0_23] : memref<1x128xf32, #tpu.memory_space<vmem>>, vector<1x128xf32>
    %31 = arith.truncf %28 : vector<8x128xf32> to vector<8x128xbf16>
    %cst_24 = arith.constant dense<0.000000e+00> : vector<8x128xf32>
    %32 = tpu.matmul %31, %29, %cst_24 {dimension_numbers = #tpu.dot_dimension_numbers<[1], [0], [0], [1], [0, 0, 1, 1], [], []>} : vector<8x128xbf16>, vector<128x128xbf16>, vector<8x128xf32> -> vector<8x128xf32>
    %33 = vector.broadcast %30 : vector<1x128xf32> to vector<8x128xf32>
    %34 = arith.addf %32, %33 : vector<8x128xf32>
    %c0_25 = arith.constant 0 : index
    %c0_26 = arith.constant 0 : index
    %35 = vector.load %arg12[%c0_25, %c0_26] : memref<8x128xf32, #tpu.memory_space<vmem>>, vector<8x128xf32>
    tpu.vector_store %arg12[%c0_25, %c0_26], %34 {strides = array<i32>} : memref<8x128xf32, #tpu.memory_space<vmem>>, vector<8x128xf32>,
    return
  }
  func.func @transform_0(%arg0: i32) -> (i32, i32) {
    %c0_i32 = arith.constant 0 : i32
    %c0_i32_0 = arith.constant 0 : i32
    return %arg0, %c0_i32 : i32, i32
  }
  func.func @transform_1(%arg0: i32) -> (i32, i32) {
    %c0_i32 = arith.constant 0 : i32
    %c0_i32_0 = arith.constant 0 : i32
    %c0_i32_1 = arith.constant 0 : i32
    return %c0_i32, %c0_i32_0 : i32, i32
  }
  func.func @transform_2(%arg0: i32) -> (i32, i32) {
    %c0_i32 = arith.constant 0 : i32
    %c0_i32_0 = arith.constant 0 : i32
    %c0_i32_1 = arith.constant 0 : i32
    return %c0_i32, %c0_i32_0 : i32, i32
  }
  func.func @transform_3(%arg0: i32) -> (i32, i32) {
    %c0_i32 = arith.constant 0 : i32
    %c0_i32_0 = arith.constant 0 : i32
    %c0_i32_1 = arith.constant 0 : i32
    return %c0_i32, %c0_i32_0 : i32, i32
  }
  func.func @transform_4(%arg0: i32) -> (i32, i32) {
    %c0_i32 = arith.constant 0 : i32
    %c0_i32_0 = arith.constant 0 : i32
    %c0_i32_1 = arith.constant 0 : i32
    return %c0_i32, %c0_i32_0 : i32, i32
  }
  func.func @transform_5(%arg0: i32) -> (i32, i32) {
    %c0_i32 = arith.constant 0 : i32
    %c0_i32_0 = arith.constant 0 : i32
    %c0_i32_1 = arith.constant 0 : i32
    return %c0_i32, %c0_i32_0 : i32, i32
  }
  func.func @transform_6(%arg0: i32) -> (i32, i32) {
    %c0_i32 = arith.constant 0 : i32
    %c0_i32_0 = arith.constant 0 : i32
    %c0_i32_1 = arith.constant 0 : i32
    return %c0_i32, %c0_i32_0 : i32, i32
  }
  func.func @transform_7(%arg0: i32) -> (i32, i32) {
    %c0_i32 = arith.constant 0 : i32
    %c0_i32_0 = arith.constant 0 : i32
    %c0_i32_1 = arith.constant 0 : i32
    return %c0_i32, %c0_i32_0 : i32, i32
  }
  func.func @transform_8(%arg0: i32) -> (i32, i32) {
    %c0_i32 = arith.constant 0 : i32
    %c0_i32_0 = arith.constant 0 : i32
    %c0_i32_1 = arith.constant 0 : i32
    return %c0_i32, %c0_i32_0 : i32, i32
  }
  func.func @transform_9(%arg0: i32) -> (i32, i32) {
    %c0_i32 = arith.constant 0 : i32
    %c0_i32_0 = arith.constant 0 : i32
    %c0_i32_1 = arith.constant 0 : i32
    return %c0_i32, %c0_i32_0 : i32, i32
  }
  func.func @transform_10(%arg0: i32) -> (i32, i32) {
    %c0_i32 = arith.constant 0 : i32
    %c0_i32_0 = arith.constant 0 : i32
    %c0_i32_1 = arith.constant 0 : i32
    return %c0_i32, %c0_i32_0 : i32, i32
  }
  func.func @transform_11(%arg0: i32) -> (i32, i32) {
    %c0_i32 = arith.constant 0 : i32
    %c0_i32_0 = arith.constant 0 : i32
    return %arg0, %c0_i32 : i32, i32
  }
}

</mosaic_0001>

<llo_original>
// kernel: mlp_forward.1
$region0: #{mlp_forward.1}
  #allocation0 [shape = 'u32[]', space=smem, size = 0x4, offset = 0x4, fixed_abs, tag = 'smem constant byte address 0x4 - core index']
  #allocation1 [shape = 'u32[72,128]{1,0:T(1,128)}', space=vmem, size = 0x9000, scoped, tag = 'internal scratch']
  %s0 = inlined_call_operand.vmem [shape: f32[8,128], index: 0, kind: input, shape index: {}]
  %s1 = inlined_call_operand.vmem [shape: bf16[128,128], index: 1, kind: input, shape index: {}]
  %s2 = inlined_call_operand.vmem [shape: f32[1,128], index: 2, kind: input, shape index: {}]
  %s3 = inlined_call_operand.vmem [shape: f32[1,128], index: 3, kind: input, shape index: {}]
  %s4 = inlined_call_operand.vmem [shape: f32[1,128], index: 4, kind: input, shape index: {}]
  %s5 = inlined_call_operand.vmem [shape: bf16[128,128], index: 5, kind: input, shape index: {}]
  %s6 = inlined_call_operand.vmem [shape: f32[1,128], index: 6, kind: input, shape index: {}]
  %s7 = inlined_call_operand.vmem [shape: f32[1,128], index: 7, kind: input, shape index: {}]
  %s8 = inlined_call_operand.vmem [shape: f32[1,128], index: 8, kind: input, shape index: {}]
  %s9 = inlined_call_operand.vmem [shape: bf16[128,128], index: 9, kind: input, shape index: {}]
  %s10 = inlined_call_operand.vmem [shape: f32[1,128], index: 10, kind: input, shape index: {}]
  %s11 = inlined_call_operand.hbm [shape: f32[8,128], index: 11, kind: output, shape index: {}]
  %s12 = sld [smem:[#allocation0]]
  $region54: #{mlp_forward.1} parent=0
    _
  %s14 = ssub.s32 1, %s12
  %s15 = scalar_select 0, %s14, %s12
  $region1: #{mlp_forward.1} parent=0
    #allocation2 [shape = 'u8[4096]{0}', space=vmem, size = 0x1000, scoped, tag = 'output window, operand 0, single buffered']
    #allocation3 [shape = 's32[1]{0}', space=sflag, size = 0x4, scoped, tag = 'scoped memory for mlp_forward.1']
    %16 = vsyncpa [#allocation3], 0
    // Predicated region
    $region2: #{mlp_forward.1} parent=1 // pred_check
      _
    $region3: #{mlp_forward.1} parent=1 // pred_check_branch
      %18 = sbr.rel (0) target = $region5
    $region4: #{mlp_forward.1} parent=1 // pred_region
      _
    $region5: #{mlp_forward.1} parent=1 // pred_fallthru
      _
    // Predicated region
    $region6: #{mlp_forward.1} parent=1 // pred_check
      _
    $region7: #{mlp_forward.1} parent=1 // pred_check_branch
      %20 = sbr.rel (0) target = $region9
    $region8: #{mlp_forward.1} parent=1 // pred_region
      _
    $region9: #{mlp_forward.1} parent=1 // pred_fallthru
      _
    // Predicated region
    $region10: #{mlp_forward.1} parent=1 // pred_check
      _
    $region11: #{mlp_forward.1} parent=1 // pred_check_branch
      %22 = sbr.rel (0) target = $region13
    $region12: #{mlp_forward.1} parent=1 // pred_region
      _
    $region13: #{mlp_forward.1} parent=1 // pred_fallthru
      _
    // Predicated region
    $region14: #{mlp_forward.1} parent=1 // pred_check
      _
    $region15: #{mlp_forward.1} parent=1 // pred_check_branch
      %24 = sbr.rel (0) target = $region17
    $region16: #{mlp_forward.1} parent=1 // pred_region
      _
    $region17: #{mlp_forward.1} parent=1 // pred_fallthru
      _
    // Predicated region
    $region18: #{mlp_forward.1} parent=1 // pred_check
      _
    $region19: #{mlp_forward.1} parent=1 // pred_check_branch
      %26 = sbr.rel (0) target = $region21
    $region20: #{mlp_forward.1} parent=1 // pred_region
      _
    $region21: #{mlp_forward.1} parent=1 // pred_fallthru
      _
    // Predicated region
    $region22: #{mlp_forward.1} parent=1 // pred_check
      _
    $region23: #{mlp_forward.1} parent=1 // pred_check_branch
      %28 = sbr.rel (0) target = $region25
    $region24: #{mlp_forward.1} parent=1 // pred_region
      _
    $region25: #{mlp_forward.1} parent=1 // pred_fallthru
      _
    // Predicated region
    $region26: #{mlp_forward.1} parent=1 // pred_check
      _
    $region27: #{mlp_forward.1} parent=1 // pred_check_branch
      %30 = sbr.rel (0) target = $region29
    $region28: #{mlp_forward.1} parent=1 // pred_region
      _
    $region29: #{mlp_forward.1} parent=1 // pred_fallthru
      _
    // Predicated region
    $region30: #{mlp_forward.1} parent=1 // pred_check
      _
    $region31: #{mlp_forward.1} parent=1 // pred_check_branch
      %32 = sbr.rel (0) target = $region33
    $region32: #{mlp_forward.1} parent=1 // pred_region
      _
    $region33: #{mlp_forward.1} parent=1 // pred_fallthru
      _
    // Predicated region
    $region34: #{mlp_forward.1} parent=1 // pred_check
      _
    $region35: #{mlp_forward.1} parent=1 // pred_check_branch
      %34 = sbr.rel (0) target = $region37
    $region36: #{mlp_forward.1} parent=1 // pred_region
      _
    $region37: #{mlp_forward.1} parent=1 // pred_fallthru
      _
    // Predicated region
    $region38: #{mlp_forward.1} parent=1 // pred_check
      _
    $region39: #{mlp_forward.1} parent=1 // pred_check_branch
      %36 = sbr.rel (0) target = $region41
    $region40: #{mlp_forward.1} parent=1 // pred_region
      _
    $region41: #{mlp_forward.1} parent=1 // pred_fallthru
      _
    // Predicated region
    $region42: #{mlp_forward.1} parent=1 // pred_check
      _
    $region43: #{mlp_forward.1} parent=1 // pred_check_branch
      %38 = sbr.rel (0) target = $region45
    $region44: #{mlp_forward.1} parent=1 // pred_region
      _
    $region45: #{mlp_forward.1} parent=1 // pred_fallthru
      _
    %v39 = vld [vmem:[%s0] sm:$0xff]
    %v40 = vld [vmem:[%s1] sm:$0xf]
    %v41 = vld [vmem:[%s1 + $0x4] sm:$0xf]
    %v42 = vld [vmem:[%s1 + $0x8] sm:$0xf]
    %v43 = vld [vmem:[%s1 + $0xc] sm:$0xf]
    %v44 = vld [vmem:[%s1 + $0x10] sm:$0xf]
    %v45 = vld [vmem:[%s1 + $0x14] sm:$0xf]
    %v46 = vld [vmem:[%s1 + $0x18] sm:$0xf]
    %v47 = vld [vmem:[%s1 + $0x1c] sm:$0xf]
    %v48 = vld [vmem:[%s1 + $0x20] sm:$0xf]
    %v49 = vld [vmem:[%s1 + $0x24] sm:$0xf]
    %v50 = vld [vmem:[%s1 + $0x28] sm:$0xf]
    %v51 = vld [vmem:[%s1 + $0x2c] sm:$0xf]
    %v52 = vld [vmem:[%s1 + $0x30] sm:$0xf]
    %v53 = vld [vmem:[%s1 + $0x34] sm:$0xf]
    %v54 = vld [vmem:[%s1 + $0x38] sm:$0xf]
    %v55 = vld [vmem:[%s1 + $0x3c] sm:$0xf]
    %v56 = vld [vmem:[%s2] sm:$0x1]
    %v57 = vpack.c.bf16 %v39, %v39
    %v59 = vperm.slane %v56, 0
    %v77 = vunpack.c.l.b16 %v40
    %v78 = vunpack.c.l.b16 %v41
    %v79 = vunpack.c.l.b16 %v42
    %v80 = vunpack.c.l.b16 %v43
    %v81 = vunpack.c.l.b16 %v44
    %v82 = vunpack.c.l.b16 %v45
    %v83 = vunpack.c.l.b16 %v46
    %v84 = vunpack.c.l.b16 %v47
    %v85 = vunpack.c.l.b16 %v48
    %v86 = vunpack.c.l.b16 %v49
    %v87 = vunpack.c.l.b16 %v50
    %v88 = vunpack.c.l.b16 %v51
    %v89 = vunpack.c.l.b16 %v52
    %v90 = vunpack.c.l.b16 %v53
    %v91 = vunpack.c.l.b16 %v54
    %v92 = vunpack.c.l.b16 %v55
    %v93 = vpack.c.b16 %v78, %v77
    %v94 = vpack.c.b16 %v80, %v79
    %v95 = vpack.c.b16 %v82, %v81
    %v96 = vpack.c.b16 %v84, %v83
    %v97 = vpack.c.b16 %v86, %v85
    %v98 = vpack.c.b16 %v88, %v87
    %v99 = vpack.c.b16 %v90, %v89
    %v100 = vpack.c.b16 %v92, %v91
    %109 = vmatpush.bf16.msra.mxu0 %v100
    %110 = vmatpush.bf16.msra.mxu0 %v99
    %111 = vmatpush.bf16.msra.mxu0 %v98
    %112 = vmatpush.bf16.msra.mxu0 %v97
    %113 = vmatpush.bf16.msra.mxu0 %v96
    %114 = vmatpush.bf16.msra.mxu0 %v95
    %115 = vmatpush.bf16.msra.mxu0 %v94
    %116 = vmatpush.bf16.msra.mxu0 %v93
    %117 = vmatmul.bf16.gmra.mxu0 %v57
    %v118 = vpop.f32.mrf.mxu0
    %v119 = vadd.f32 %v59, %v118
    %v120 = vpop.f32.mrf.mxu0
    %121 = vdwg.mxu0
    %v122 = vmax.f32 %v119, 0.0
    %v123 = vld [vmem:[%s3] sm:$0x1]
    %v124 = vld [vmem:[%s4] sm:$0x1]
    %v126 = vperm.slane %v123, 0
    %v128 = vmul.f32 %v122, %v126
    %v130 = vperm.slane %v124, 0
    %v132 = vadd.f32 %v128, %v130
    %v133 = vld [vmem:[%s5] sm:$0xf]
    %v134 = vld [vmem:[%s5 + $0x4] sm:$0xf]
    %v135 = vld [vmem:[%s5 + $0x8] sm:$0xf]
    %v136 = vld [vmem:[%s5 + $0xc] sm:$0xf]
    %v137 = vld [vmem:[%s5 + $0x10] sm:$0xf]
    %v138 = vld [vmem:[%s5 + $0x14] sm:$0xf]
    %v139 = vld [vmem:[%s5 + $0x18] sm:$0xf]
    %v140 = vld [vmem:[%s5 + $0x1c] sm:$0xf]
    %v141 = vld [vmem:[%s5 + $0x20] sm:$0xf]
    %v142 = vld [vmem:[%s5 + $0x24] sm:$0xf]
    %v143 = vld [vmem:[%s5 + $0x28] sm:$0xf]
    %v144 = vld [vmem:[%s5 + $0x2c] sm:$0xf]
    %v145 = vld [vmem:[%s5 + $0x30] sm:$0xf]
    %v146 = vld [vmem:[%s5 + $0x34] sm:$0xf]
    %v147 = vld [vmem:[%s5 + $0x38] sm:$0xf]
    %v148 = vld [vmem:[%s5 + $0x3c] sm:$0xf]
    %v149 = vld [vmem:[%s6] sm:$0x1]
    %v150 = vpack.c.bf16 %v132, %v132
    %v152 = vperm.slane %v149, 0
    %v170 = vunpack.c.l.b16 %v133
    %v171 = vunpack.c.l.b16 %v134
    %v172 = vunpack.c.l.b16 %v135
    %v173 = vunpack.c.l.b16 %v136
    %v174 = vunpack.c.l.b16 %v137
    %v175 = vunpack.c.l.b16 %v138
    %v176 = vunpack.c.l.b16 %v139
    %v177 = vunpack.c.l.b16 %v140
    %v178 = vunpack.c.l.b16 %v141
    %v179 = vunpack.c.l.b16 %v142
    %v180 = vunpack.c.l.b16 %v143
    %v181 = vunpack.c.l.b16 %v144
    %v182 = vunpack.c.l.b16 %v145
    %v183 = vunpack.c.l.b16 %v146
    %v184 = vunpack.c.l.b16 %v147
    %v185 = vunpack.c.l.b16 %v148
    %v186 = vpack.c.b16 %v171, %v170
    %v187 = vpack.c.b16 %v173, %v172
    %v188 = vpack.c.b16 %v175, %v174
    %v189 = vpack.c.b16 %v177, %v176
    %v190 = vpack.c.b16 %v179, %v178
    %v191 = vpack.c.b16 %v181, %v180
    %v192 = vpack.c.b16 %v183, %v182
    %v193 = vpack.c.b16 %v185, %v184
    %202 = vmatpush.bf16.msra.mxu0 %v193
    %203 = vmatpush.bf16.msra.mxu0 %v192
    %204 = vmatpush.bf16.msra.mxu0 %v191
    %205 = vmatpush.bf16.msra.mxu0 %v190
    %206 = vmatpush.bf16.msra.mxu0 %v189
    %207 = vmatpush.bf16.msra.mxu0 %v188
    %208 = vmatpush.bf16.msra.mxu0 %v187
    %209 = vmatpush.bf16.msra.mxu0 %v186
    %210 = vmatmul.bf16.gmra.mxu0 %v150
    %v211 = vpop.f32.mrf.mxu0
    %v212 = vadd.f32 %v152, %v211
    %v213 = vpop.f32.mrf.mxu0
    %214 = vdwg.mxu0
    %v215 = vmax.f32 %v212, 0.0
    %v216 = vld [vmem:[%s7] sm:$0x1]
    %v217 = vld [vmem:[%s8] sm:$0x1]
    %v219 = vperm.slane %v216, 0
    %v221 = vmul.f32 %v215, %v219
    %v223 = vperm.slane %v217, 0
    %v225 = vadd.f32 %v221, %v223
    %v226 = vld [vmem:[%s9] sm:$0xf]
    %v227 = vld [vmem:[%s9 + $0x4] sm:$0xf]
    %v228 = vld [vmem:[%s9 + $0x8] sm:$0xf]
    %v229 = vld [vmem:[%s9 + $0xc] sm:$0xf]
    %v230 = vld [vmem:[%s9 + $0x10] sm:$0xf]
    %v231 = vld [vmem:[%s9 + $0x14] sm:$0xf]
    %v232 = vld [vmem:[%s9 + $0x18] sm:$0xf]
    %v233 = vld [vmem:[%s9 + $0x1c] sm:$0xf]
    %v234 = vld [vmem:[%s9 + $0x20] sm:$0xf]
    %v235 = vld [vmem:[%s9 + $0x24] sm:$0xf]
    %v236 = vld [vmem:[%s9 + $0x28] sm:$0xf]
    %v237 = vld [vmem:[%s9 + $0x2c] sm:$0xf]
    %v238 = vld [vmem:[%s9 + $0x30] sm:$0xf]
    %v239 = vld [vmem:[%s9 + $0x34] sm:$0xf]
    %v240 = vld [vmem:[%s9 + $0x38] sm:$0xf]
    %v241 = vld [vmem:[%s9 + $0x3c] sm:$0xf]
    %v242 = vld [vmem:[%s10] sm:$0x1]
    %v243 = vpack.c.bf16 %v225, %v225
    %v245 = vperm.slane %v242, 0
    %v263 = vunpack.c.l.b16 %v226
    %v264 = vunpack.c.l.b16 %v227
    %v265 = vunpack.c.l.b16 %v228
    %v266 = vunpack.c.l.b16 %v229
    %v267 = vunpack.c.l.b16 %v230
    %v268 = vunpack.c.l.b16 %v231
    %v269 = vunpack.c.l.b16 %v232
    %v270 = vunpack.c.l.b16 %v233
    %v271 = vunpack.c.l.b16 %v234
    %v272 = vunpack.c.l.b16 %v235
    %v273 = vunpack.c.l.b16 %v236
    %v274 = vunpack.c.l.b16 %v237
    %v275 = vunpack.c.l.b16 %v238
    %v276 = vunpack.c.l.b16 %v239
    %v277 = vunpack.c.l.b16 %v240
    %v278 = vunpack.c.l.b16 %v241
    %v279 = vpack.c.b16 %v264, %v263
    %v280 = vpack.c.b16 %v266, %v265
    %v281 = vpack.c.b16 %v268, %v267
    %v282 = vpack.c.b16 %v270, %v269
    %v283 = vpack.c.b16 %v272, %v271
    %v284 = vpack.c.b16 %v274, %v273
    %v285 = vpack.c.b16 %v276, %v275
    %v286 = vpack.c.b16 %v278, %v277
    %295 = vmatpush.bf16.msra.mxu0 %v286
    %296 = vmatpush.bf16.msra.mxu0 %v285
    %297 = vmatpush.bf16.msra.mxu0 %v284
    %298 = vmatpush.bf16.msra.mxu0 %v283
    %299 = vmatpush.bf16.msra.mxu0 %v282
    %300 = vmatpush.bf16.msra.mxu0 %v281
    %301 = vmatpush.bf16.msra.mxu0 %v280
    %302 = vmatpush.bf16.msra.mxu0 %v279
    %303 = vmatmul.bf16.gmra.mxu0 %v243
    %v304 = vpop.f32.mrf.mxu0
    %v305 = vadd.f32 %v245, %v304
    %v306 = vpop.f32.mrf.mxu0
    %307 = vdwg.mxu0
    %308 = vst [vmem:[#allocation2] sm:$0xff] %v305
    // Predicated region
    $region46: #{mlp_forward.1} parent=1 // pred_check
      _
    $region47: #{mlp_forward.1} parent=1 // pred_check_branch
      %310 = sbr.rel (0) target = $region49
    $region48: #{mlp_forward.1} parent=1 // pred_region
      %312 = vsyncadd [#allocation3], 0
      %s314 = sshll.u32 [#allocation2], 4
      %s315 = int_to_ptr.vmem [resolvable:$true] %s314
      %s316 = sshll.u32 %s11, 4
      %s317 = int_to_ptr.hbm [resolvable:$true] %s316
      %319 = dma.vmem_to_hbm [thread:$0]  %s315, 128, %s317, [#allocation3]
    $region49: #{mlp_forward.1} parent=1 // pred_fallthru
      _
    // Predicated region
    $region50: #{mlp_forward.1} parent=1 // pred_check
      _
    $region51: #{mlp_forward.1} parent=1 // pred_check_branch
      %321 = sbr.rel (0) target = $region53
    $region52: #{mlp_forward.1} parent=1 // pred_region
      %323 = dma.done [#allocation3], 128
    $region53: #{mlp_forward.1} parent=1 // pred_fallthru
      _
    %324 = vsyncpa [#allocation3], 1

</llo_original>
